<compile_context>
chip_gen: v5e
topology: v5e:2x2
jax: 0.10.0
libtpu: 0.0.40
codegen_flags: <defaults>
</compile_context>

<pallas_src>
import functools
import math

import jax
import jax.numpy as jnp
from jax import lax
from jax.experimental import pallas as pl
from jax.experimental.pallas import tpu as pltpu


# ---------------------------------------------------------------------------
# Fused kernel: full CCPM stack for one batch block
# ---------------------------------------------------------------------------
def _ccpm_fused_kernel(wb_ref, x_ref, out_ref, buf0, buf1, *, layer_cfgs, lanes):
    """Fused Conv2dSame((w,1)) + Tanh + KMaxPooling stack for one batch block.

    wb_ref : SMEM (n_params,)  all conv weights & biases, flattened
    x_ref  : VMEM (H0, lanes)  layer-0 input (cin == 1), lanes = TB * emb
    out_ref: VMEM (cout_last, k_last, lanes)
    buf0/1 : VMEM (C_max, HP_max, lanes) ping-pong buffers holding the
             SAME-padded input of the current layer.
    layer_cfgs[i] = (cin, cout, width, h_in, k_out, w_off, b_off)  (static)
    """
    bufs = (buf0, buf1)
    n_layers = len(layer_cfgs)

    # ---- stage the layer-0 input (plus its SAME padding rows) into buf0 ----
    _, _, width0, h_in0, _, _, _ = layer_cfgs[0]
    pad0 = width0 - 1
    pt0 = pad0 // 2                      # TF-SAME: floor(pad/2) on top
    if pt0 > 0:
        buf0[0, 0:pt0, :] = jnp.zeros((pt0, lanes), jnp.float32)
    buf0[0, pt0:pt0 + h_in0, :] = x_ref[...].astype(jnp.float32)
    if pad0 - pt0 > 0:
        buf0[0, pt0 + h_in0:pt0 + h_in0 + (pad0 - pt0), :] = jnp.zeros(
            (pad0 - pt0, lanes), jnp.float32)

    for li, (cin, cout, width, h, k, w_off, b_off) in enumerate(layer_cfgs):
        src = bufs[li % 2]
        dst = bufs[(li + 1) % 2]
        last = li == n_layers - 1

        if last:
            npt, nrows = 0, k                       # raw top-k rows to out_ref
        else:
            npad = layer_cfgs[li + 1][2] - 1        # next layer's SAME pad
            npt = npad // 2
            nrows = k + npad                        # padded rows of next input

        row_iota = lax.broadcasted_iota(jnp.int32, (nrows, lanes), 0)
        h_iota = lax.broadcasted_iota(jnp.int32, (h, lanes), 0)

        # NOTE: fully unrolled -- cout*cin*width is tiny for CCPM configs.  If
        # filter counts grow, switch the `co` loop to
        # lax.fori_loop(..., unroll=True) to bound vreg live ranges.
        for co in range(cout):
            # ---- Conv2dSame((width, 1)): 1-D cross-correlation along the
            #      field (sublane) axis, broadcast across lanes.  Pure VPU. ----
            acc = jnp.full((h, lanes), wb_ref[b_off + co], dtype=jnp.float32)
            for ci in range(cin):
                for dh in range(width):
                    wv = wb_ref[w_off + (co * cin + ci) * width + dh]
                    acc = acc + wv * src[ci, dh:dh + h, :]
            # ---- Tanh (EUP slot -- overlaps with VALU work) ----
            cur = jnp.tanh(acc)
            # ---- KMaxPooling(k, axis=field): sorted-descending top-k per lane
            #      column, assembled into one slab (including the next layer's
            #      zero padding rows) -> exactly one store per channel. ----
            slab = jnp.zeros((nrows, lanes), jnp.float32)
            for j in range(k):
                mx = jnp.max(cur, axis=0, keepdims=True)            # (1, lanes)
                slab = jnp.where(row_iota == (npt + j), mx, slab)
                if j + 1 < k:
                    # mask only the FIRST occurrence of the max in each column
                    # (exactly matches torch.topk tie handling on values).
                    first = jnp.min(jnp.where(cur == mx, h_iota, h),
                                    axis=0, keepdims=True)
                    cur = jnp.where(h_iota == first, -jnp.inf, cur)
            if last:
                out_ref[co, :, :] = slab
            else:
                dst[co, 0:nrows, :] = slab


# ---------------------------------------------------------------------------
# Wrapper: mirrors deepctr_torch ConvLayer forward (including its k formula)
# ---------------------------------------------------------------------------
def conv_layer_forward(x, params, field_size, conv_kernel_width, conv_filters,
                       *, target_lanes=1024):
    """x: (batch, 1, field_size, embedding_size) -> (batch, last_filters, k_last, emb)."""
    bsz, cin0, h0, e = x.shape
    assert cin0 == 1 and h0 == int(field_size)
    l = len(conv_filters)
    n = int(field_size)

    # ---- static per-layer config (mirrors ConvLayer.__init__) ----
    cfgs, flat = [], []
    offset = 0
    field_shape = n
    for i in range(1, l + 1):
        cin = 1 if i == 1 else conv_filters[i - 2]
        cout = conv_filters[i - 1]
        width = conv_kernel_width[i - 1]
        k = max(1, int(1 - pow(i / l, l - i) * n)) if i < l else 3
        k = min(k, field_shape)
        w, b = params[i - 1]
        w_off = offset
        offset += cout * cin * width
        b_off = offset
        offset += cout
        flat += [w.reshape(-1).astype(jnp.float32), b.astype(jnp.float32)]
        cfgs.append((cin, cout, width, field_shape, k, w_off, b_off))
        field_shape = k
    wb = jnp.concatenate(flat)
    cout_l, k_l = cfgs[-1][1], cfgs[-1][4]

    # ---- batch blocking: pack TB batch rows into the lane axis ----
    tb_unit = 128 // math.gcd(e, 128)        # smallest TB making TB*E % 128 == 0
    blocks_needed = -(-bsz // tb_unit)
    mult = max(1, min(target_lanes // (tb_unit * e), blocks_needed))
    tb = tb_unit * mult
    bsz_pad = -(-bsz // tb) * tb
    lanes = tb * e

    xs = x[:, 0, :, :]
    if bsz_pad != bsz:
        xs = jnp.pad(xs, ((0, bsz_pad - bsz), (0, 0), (0, 0)))
    # lane-dense layout (layout plumbing only): (H0, B*E)
    x2 = jnp.transpose(xs, (1, 0, 2)).reshape(h0, bsz_pad * e)

    c_max = max([1] + list(conv_filters))
    hp_max = max(c[3] + c[2] - 1 for c in cfgs)      # h_in + width - 1

    kernel = functools.partial(_ccpm_fused_kernel,
                               layer_cfgs=tuple(cfgs), lanes=lanes)
    out_flat = pl.pallas_call(
        kernel,
        out_shape=jax.ShapeDtypeStruct((cout_l, k_l, bsz_pad * e), jnp.float32),
        grid_spec=pltpu.PrefetchScalarGridSpec(
            num_scalar_prefetch=0,
            grid=(bsz_pad // tb,),
            in_specs=[
                pl.BlockSpec(memory_space=pltpu.MemorySpace.SMEM),   # weights+bias
                pl.BlockSpec((h0, lanes), lambda i: (0, i)),
            ],
            out_specs=pl.BlockSpec((cout_l, k_l, lanes), lambda i: (0, 0, i)),
            scratch_shapes=[pltpu.VMEM((c_max, hp_max, lanes), jnp.float32),
                            pltpu.VMEM((c_max, hp_max, lanes), jnp.float32)],
        ),
        compiler_params=pltpu.CompilerParams(
            dimension_semantics=("parallel",)),
    )(wb, x2)

    out = out_flat.reshape(cout_l, k_l, bsz_pad, e)
    out = jnp.transpose(out, (2, 0, 1, 3))
    return out[:bsz]


def make_conv_layer_params(key, field_size, conv_kernel_width, conv_filters):
    params = []
    l = len(conv_filters)
    for i in range(1, l + 1):
        in_ch = 1 if i == 1 else conv_filters[i - 2]
        out_ch = conv_filters[i - 1]
        width = conv_kernel_width[i - 1]
        key, k1, k2 = jax.random.split(key, 3)
        bound = 1.0 / math.sqrt(in_ch * width)
        wgt = jax.random.uniform(k1, (out_ch, in_ch, width), jnp.float32, -bound, bound)
        bias = jax.random.uniform(k2, (out_ch,), jnp.float32, -bound, bound)
        params.append((wgt, bias))
    return params


# ---------------------------------------------------------------------------
# Pure-JAX reference (for verification only)
# ---------------------------------------------------------------------------
def _reference_block(x, w, b, k):
    bsz, cin, h, e = x.shape
    cout, _, width = w.shape
    pad = width - 1
    pad_top = pad // 2
    xpad = jnp.pad(x, ((0, 0), (0, 0), (pad_top, pad - pad_top), (0, 0)))
    out = jnp.zeros((bsz, cout, h, e), jnp.float32) + b[None, :, None, None]
    for ci in range(cin):
        for dh in range(width):
            out = out + w[None, :, ci, dh, None, None] * xpad[:, None, ci, dh:dh + h, :]
    act = jnp.tanh(out)
    vals = lax.top_k(jnp.swapaxes(act, 2, 3), k)[0]      # top-k over field axis
    return jnp.swapaxes(vals, 2, 3)


def _reference_forward(x, params, field_size, conv_kernel_width, conv_filters):
    l = len(conv_filters)
    n = int(field_size)
    field_shape = n
    h = x
    for i in range(1, l + 1):
        wgt, bias = params[i - 1]
        k = max(1, int(1 - pow(i / l, l - i) * n)) if i < l else 3
        k = min(k, field_shape)
        h = _reference_block(h, wgt, bias, k)
        field_shape = k
    return h


if __name__ == "__main__":
    key = jax.random.PRNGKey(0)

    configs = [
        # (batch, field_size, embedding_size, conv_kernel_width, conv_filters)
        (2, 8, 16, [3, 3], [3, 4]),        # two stacked blocks, single grid step
        (2, 8, 16, [3], [4]),              # single block -> real top-k with k=3
        (2, 8, 16, [3, 2, 3], [4, 3, 2]),  # three blocks, even kernel width
        (256, 8, 16, [3, 3], [3, 4]),      # larger batch -> multiple grid steps
    ]

    for batch, field_size, emb, widths, filters in configs:
        key, kx, kp = jax.random.split(key, 3)
        x = jax.random.normal(kx, (batch, 1, field_size, emb), jnp.float32)
        params = make_conv_layer_params(kp, field_size, widths, filters)

        out = conv_layer_forward(x, params, field_size, widths, filters)
        out = jax.block_until_ready(out)

        ref = _reference_forward(x, params, field_size, widths, filters)
        assert out.shape == ref.shape, (out.shape, ref.shape)
        assert jnp.allclose(out, ref, rtol=1e-4, atol=1e-4), (
            float(jnp.max(jnp.abs(out - ref))))

    print("KERNEL_OK")
</pallas_src>

<mosaic_0001>
module attributes {stable_mosaic.version = 11 : i64} {
  func.func @_ccpm_fused_kernel(%arg0: i32, %arg1: memref<52xf32, #tpu.memory_space<smem>>, %arg2: memref<8x128xf32, #tpu.memory_space<vmem>>, %arg3: memref<4x1x128xf32, #tpu.memory_space<vmem>>, %arg4: memref<4x10x128xf32, #tpu.memory_space<vmem>>, %arg5: memref<4x10x128xf32, #tpu.memory_space<vmem>>) attributes {dimension_semantics = [#tpu.dimension_semantics<parallel>], iteration_bounds = array<i64: 1>, scalar_prefetch = 0 : i64, scratch_operands = 2 : i64, tpu.core_type = #tpu.core_type<tc>, window_params = [{transform_indices = @transform_0, window_bounds = array<i64: 52>}, {transform_indices = @transform_1, window_bounds = array<i64: 8, 128>}, {transform_indices = @transform_2, window_bounds = array<i64: 4, 1, 128>}]} {
    %cst = arith.constant 0.000000e+00 : f32
    %0 = vector.broadcast %cst : f32 to vector<1x128xf32>
    %c0 = arith.constant 0 : index
    %c0_0 = arith.constant 0 : index
    %c0_1 = arith.constant 0 : index
    %1 = vector.load %arg4[%c0, %c0_0, %c0_1] : memref<4x10x128xf32, #tpu.memory_space<vmem>>, vector<1x1x128xf32>
    %2 = vector.shape_cast %1 : vector<1x1x128xf32> to vector<1x128xf32>
    %3 = vector.shape_cast %0 : vector<1x128xf32> to vector<1x1x128xf32>
    tpu.vector_store %arg4[%c0, %c0_0, %c0_1], %3 {strides = array<i32>} : memref<4x10x128xf32, #tpu.memory_space<vmem>>, vector<1x1x128xf32>,
    %c0_2 = arith.constant 0 : index
    %c0_3 = arith.constant 0 : index
    %4 = vector.load %arg2[%c0_2, %c0_3] : memref<8x128xf32, #tpu.memory_space<vmem>>, vector<8x128xf32>
    %c0_4 = arith.constant 0 : index
    %c1 = arith.constant 1 : index
    %c0_5 = arith.constant 0 : index
    %5 = vector.load %arg4[%c0_4, %c1, %c0_5] : memref<4x10x128xf32, #tpu.memory_space<vmem>>, vector<1x8x128xf32>
    %6 = vector.shape_cast %5 : vector<1x8x128xf32> to vector<8x128xf32>
    %7 = vector.shape_cast %4 : vector<8x128xf32> to vector<1x8x128xf32>
    tpu.vector_store %arg4[%c0_4, %c1, %c0_5], %7 {strides = array<i32>} : memref<4x10x128xf32, #tpu.memory_space<vmem>>, vector<1x8x128xf32>,
    %cst_6 = arith.constant 0.000000e+00 : f32
    %8 = vector.broadcast %cst_6 : f32 to vector<1x128xf32>
    %c0_7 = arith.constant 0 : index
    %c9 = arith.constant 9 : index
    %c0_8 = arith.constant 0 : index
    %9 = vector.load %arg4[%c0_7, %c9, %c0_8] : memref<4x10x128xf32, #tpu.memory_space<vmem>>, vector<1x1x128xf32>
    %10 = vector.shape_cast %9 : vector<1x1x128xf32> to vector<1x128xf32>
    %11 = vector.shape_cast %8 : vector<1x128xf32> to vector<1x1x128xf32>
    tpu.vector_store %arg4[%c0_7, %c9, %c0_8], %11 {strides = array<i32>} : memref<4x10x128xf32, #tpu.memory_space<vmem>>, vector<1x1x128xf32>,
    %12 = tpu.iota {dimensions = array<i32: 0>} : vector<3x128xi32>
    %c9_9 = arith.constant 9 : index
    %13 = memref.load %arg1[%c9_9] : memref<52xf32, #tpu.memory_space<smem>>
    %14 = vector.broadcast %13 : f32 to vector<8x128xf32>
    %c0_10 = arith.constant 0 : index
    %15 = memref.load %arg1[%c0_10] : memref<52xf32, #tpu.memory_space<smem>>
    %c0_11 = arith.constant 0 : index
    %c0_12 = arith.constant 0 : index
    %c0_13 = arith.constant 0 : index
    %16 = vector.load %arg4[%c0_11, %c0_12, %c0_13] : memref<4x10x128xf32, #tpu.memory_space<vmem>>, vector<1x8x128xf32>
    %17 = vector.shape_cast %16 : vector<1x8x128xf32> to vector<8x128xf32>
    %18 = vector.broadcast %15 : f32 to vector<8x128xf32>
    %19 = arith.mulf %18, %17 : vector<8x128xf32>
    %20 = arith.addf %14, %19 : vector<8x128xf32>
    %c1_14 = arith.constant 1 : index
    %21 = memref.load %arg1[%c1_14] : memref<52xf32, #tpu.memory_space<smem>>
    %c0_15 = arith.constant 0 : index
    %c1_16 = arith.constant 1 : index
    %c0_17 = arith.constant 0 : index
    %22 = vector.load %arg4[%c0_15, %c1_16, %c0_17] : memref<4x10x128xf32, #tpu.memory_space<vmem>>, vector<1x8x128xf32>
    %23 = vector.shape_cast %22 : vector<1x8x128xf32> to vector<8x128xf32>
    %24 = vector.broadcast %21 : f32 to vector<8x128xf32>
    %25 = arith.mulf %24, %23 : vector<8x128xf32>
    %26 = arith.addf %20, %25 : vector<8x128xf32>
    %c2 = arith.constant 2 : index
    %27 = memref.load %arg1[%c2] : memref<52xf32, #tpu.memory_space<smem>>
    %c0_18 = arith.constant 0 : index
    %c2_19 = arith.constant 2 : index
    %c0_20 = arith.constant 0 : index
    %28 = vector.load %arg4[%c0_18, %c2_19, %c0_20] : memref<4x10x128xf32, #tpu.memory_space<vmem>>, vector<1x8x128xf32>
    %29 = vector.shape_cast %28 : vector<1x8x128xf32> to vector<8x128xf32>
    %30 = vector.broadcast %27 : f32 to vector<8x128xf32>
    %31 = arith.mulf %30, %29 : vector<8x128xf32>
    %32 = arith.addf %26, %31 : vector<8x128xf32>
    %33 = math.tanh %32 : vector<8x128xf32>
    %cst_21 = arith.constant 0.000000e+00 : f32
    %34 = vector.broadcast %cst_21 : f32 to vector<3x128xf32>
    %cst_22 = arith.constant dense<0xFF800000> : vector<128xf32>
    %35 = vector.multi_reduction <maximumf>, %33, %cst_22 [0] : vector<8x128xf32> to vector<128xf32>
    %36 = vector.shape_cast %35 : vector<128xf32> to vector<1x128xf32>
    %c1_i32 = arith.constant 1 : i32
    %37 = vector.broadcast %c1_i32 : i32 to vector<3x128xi32>
    %38 = arith.cmpi eq, %12, %37 : vector<3x128xi32>
    %39 = vector.shape_cast %36 : vector<1x128xf32> to vector<1x128xf32>
    %40 = vector.broadcast %39 : vector<1x128xf32> to vector<3x128xf32>
    %41 = arith.select %38, %40, %34 : vector<3x128xi1>, vector<3x128xf32>
    %c0_23 = arith.constant 0 : index
    %c0_24 = arith.constant 0 : index
    %c0_25 = arith.constant 0 : index
    %42 = vector.load %arg5[%c0_23, %c0_24, %c0_25] : memref<4x10x128xf32, #tpu.memory_space<vmem>>, vector<1x3x128xf32>
    %43 = vector.shape_cast %42 : vector<1x3x128xf32> to vector<3x128xf32>
    %44 = vector.shape_cast %41 : vector<3x128xf32> to vector<1x3x128xf32>
    tpu.vector_store %arg5[%c0_23, %c0_24, %c0_25], %44 {strides = array<i32>} : memref<4x10x128xf32, #tpu.memory_space<vmem>>, vector<1x3x128xf32>,
    %c10 = arith.constant 10 : index
    %45 = memref.load %arg1[%c10] : memref<52xf32, #tpu.memory_space<smem>>
    %46 = vector.broadcast %45 : f32 to vector<8x128xf32>
    %c3 = arith.constant 3 : index
    %47 = memref.load %arg1[%c3] : memref<52xf32, #tpu.memory_space<smem>>
    %c0_26 = arith.constant 0 : index
    %c0_27 = arith.constant 0 : index
    %c0_28 = arith.constant 0 : index
    %48 = vector.load %arg4[%c0_26, %c0_27, %c0_28] : memref<4x10x128xf32, #tpu.memory_space<vmem>>, vector<1x8x128xf32>
    %49 = vector.shape_cast %48 : vector<1x8x128xf32> to vector<8x128xf32>
    %50 = vector.broadcast %47 : f32 to vector<8x128xf32>
    %51 = arith.mulf %50, %49 : vector<8x128xf32>
    %52 = arith.addf %46, %51 : vector<8x128xf32>
    %c4 = arith.constant 4 : index
    %53 = memref.load %arg1[%c4] : memref<52xf32, #tpu.memory_space<smem>>
    %c0_29 = arith.constant 0 : index
    %c1_30 = arith.constant 1 : index
    %c0_31 = arith.constant 0 : index
    %54 = vector.load %arg4[%c0_29, %c1_30, %c0_31] : memref<4x10x128xf32, #tpu.memory_space<vmem>>, vector<1x8x128xf32>
    %55 = vector.shape_cast %54 : vector<1x8x128xf32> to vector<8x128xf32>
    %56 = vector.broadcast %53 : f32 to vector<8x128xf32>
    %57 = arith.mulf %56, %55 : vector<8x128xf32>
    %58 = arith.addf %52, %57 : vector<8x128xf32>
    %c5 = arith.constant 5 : index
    %59 = memref.load %arg1[%c5] : memref<52xf32, #tpu.memory_space<smem>>
    %c0_32 = arith.constant 0 : index
    %c2_33 = arith.constant 2 : index
    %c0_34 = arith.constant 0 : index
    %60 = vector.load %arg4[%c0_32, %c2_33, %c0_34] : memref<4x10x128xf32, #tpu.memory_space<vmem>>, vector<1x8x128xf32>
    %61 = vector.shape_cast %60 : vector<1x8x128xf32> to vector<8x128xf32>
    %62 = vector.broadcast %59 : f32 to vector<8x128xf32>
    %63 = arith.mulf %62, %61 : vector<8x128xf32>
    %64 = arith.addf %58, %63 : vector<8x128xf32>
    %65 = math.tanh %64 : vector<8x128xf32>
    %cst_35 = arith.constant 0.000000e+00 : f32
    %66 = vector.broadcast %cst_35 : f32 to vector<3x128xf32>
    %cst_36 = arith.constant dense<0xFF800000> : vector<128xf32>
    %67 = vector.multi_reduction <maximumf>, %65, %cst_36 [0] : vector<8x128xf32> to vector<128xf32>
    %68 = vector.shape_cast %67 : vector<128xf32> to vector<1x128xf32>
    %c1_i32_37 = arith.constant 1 : i32
    %69 = vector.broadcast %c1_i32_37 : i32 to vector<3x128xi32>
    %70 = arith.cmpi eq, %12, %69 : vector<3x128xi32>
    %71 = vector.shape_cast %68 : vector<1x128xf32> to vector<1x128xf32>
    %72 = vector.broadcast %71 : vector<1x128xf32> to vector<3x128xf32>
    %73 = arith.select %70, %72, %66 : vector<3x128xi1>, vector<3x128xf32>
    %c1_38 = arith.constant 1 : index
    %c0_39 = arith.constant 0 : index
    %c0_40 = arith.constant 0 : index
    %74 = vector.load %arg5[%c1_38, %c0_39, %c0_40] : memref<4x10x128xf32, #tpu.memory_space<vmem>>, vector<1x3x128xf32>
    %75 = vector.shape_cast %74 : vector<1x3x128xf32> to vector<3x128xf32>
    %76 = vector.shape_cast %73 : vector<3x128xf32> to vector<1x3x128xf32>
    tpu.vector_store %arg5[%c1_38, %c0_39, %c0_40], %76 {strides = array<i32>} : memref<4x10x128xf32, #tpu.memory_space<vmem>>, vector<1x3x128xf32>,
    %c11 = arith.constant 11 : index
    %77 = memref.load %arg1[%c11] : memref<52xf32, #tpu.memory_space<smem>>
    %78 = vector.broadcast %77 : f32 to vector<8x128xf32>
    %c6 = arith.constant 6 : index
    %79 = memref.load %arg1[%c6] : memref<52xf32, #tpu.memory_space<smem>>
    %c0_41 = arith.constant 0 : index
    %c0_42 = arith.constant 0 : index
    %c0_43 = arith.constant 0 : index
    %80 = vector.load %arg4[%c0_41, %c0_42, %c0_43] : memref<4x10x128xf32, #tpu.memory_space<vmem>>, vector<1x8x128xf32>
    %81 = vector.shape_cast %80 : vector<1x8x128xf32> to vector<8x128xf32>
    %82 = vector.broadcast %79 : f32 to vector<8x128xf32>
    %83 = arith.mulf %82, %81 : vector<8x128xf32>
    %84 = arith.addf %78, %83 : vector<8x128xf32>
    %c7 = arith.constant 7 : index
    %85 = memref.load %arg1[%c7] : memref<52xf32, #tpu.memory_space<smem>>
    %c0_44 = arith.constant 0 : index
    %c1_45 = arith.constant 1 : index
    %c0_46 = arith.constant 0 : index
    %86 = vector.load %arg4[%c0_44, %c1_45, %c0_46] : memref<4x10x128xf32, #tpu.memory_space<vmem>>, vector<1x8x128xf32>
    %87 = vector.shape_cast %86 : vector<1x8x128xf32> to vector<8x128xf32>
    %88 = vector.broadcast %85 : f32 to vector<8x128xf32>
    %89 = arith.mulf %88, %87 : vector<8x128xf32>
    %90 = arith.addf %84, %89 : vector<8x128xf32>
    %c8 = arith.constant 8 : index
    %91 = memref.load %arg1[%c8] : memref<52xf32, #tpu.memory_space<smem>>
    %c0_47 = arith.constant 0 : index
    %c2_48 = arith.constant 2 : index
    %c0_49 = arith.constant 0 : index
    %92 = vector.load %arg4[%c0_47, %c2_48, %c0_49] : memref<4x10x128xf32, #tpu.memory_space<vmem>>, vector<1x8x128xf32>
    %93 = vector.shape_cast %92 : vector<1x8x128xf32> to vector<8x128xf32>
    %94 = vector.broadcast %91 : f32 to vector<8x128xf32>
    %95 = arith.mulf %94, %93 : vector<8x128xf32>
    %96 = arith.addf %90, %95 : vector<8x128xf32>
    %97 = math.tanh %96 : vector<8x128xf32>
    %cst_50 = arith.constant 0.000000e+00 : f32
    %98 = vector.broadcast %cst_50 : f32 to vector<3x128xf32>
    %cst_51 = arith.constant dense<0xFF800000> : vector<128xf32>
    %99 = vector.multi_reduction <maximumf>, %97, %cst_51 [0] : vector<8x128xf32> to vector<128xf32>
    %100 = vector.shape_cast %99 : vector<128xf32> to vector<1x128xf32>
    %c1_i32_52 = arith.constant 1 : i32
    %101 = vector.broadcast %c1_i32_52 : i32 to vector<3x128xi32>
    %102 = arith.cmpi eq, %12, %101 : vector<3x128xi32>
    %103 = vector.shape_cast %100 : vector<1x128xf32> to vector<1x128xf32>
    %104 = vector.broadcast %103 : vector<1x128xf32> to vector<3x128xf32>
    %105 = arith.select %102, %104, %98 : vector<3x128xi1>, vector<3x128xf32>
    %c2_53 = arith.constant 2 : index
    %c0_54 = arith.constant 0 : index
    %c0_55 = arith.constant 0 : index
    %106 = vector.load %arg5[%c2_53, %c0_54, %c0_55] : memref<4x10x128xf32, #tpu.memory_space<vmem>>, vector<1x3x128xf32>
    %107 = vector.shape_cast %106 : vector<1x3x128xf32> to vector<3x128xf32>
    %108 = vector.shape_cast %105 : vector<3x128xf32> to vector<1x3x128xf32>
    tpu.vector_store %arg5[%c2_53, %c0_54, %c0_55], %108 {strides = array<i32>} : memref<4x10x128xf32, #tpu.memory_space<vmem>>, vector<1x3x128xf32>,
    %109 = tpu.iota {dimensions = array<i32: 0>} : vector<1x128xi32>
    %c48 = arith.constant 48 : index
    %110 = memref.load %arg1[%c48] : memref<52xf32, #tpu.memory_space<smem>>
    %111 = vector.broadcast %110 : f32 to vector<1x128xf32>
    %c12 = arith.constant 12 : index
    %112 = memref.load %arg1[%c12] : memref<52xf32, #tpu.memory_space<smem>>
    %c0_56 = arith.constant 0 : index
    %c0_57 = arith.constant 0 : index
    %c0_58 = arith.constant 0 : index
    %113 = vector.load %arg5[%c0_56, %c0_57, %c0_58] : memref<4x10x128xf32, #tpu.memory_space<vmem>>, vector<1x1x128xf32>
    %114 = vector.shape_cast %113 : vector<1x1x128xf32> to vector<1x128xf32>
    %115 = vector.broadcast %112 : f32 to vector<1x128xf32>
    %116 = arith.mulf %115, %114 : vector<1x128xf32>
    %117 = arith.addf %111, %116 : vector<1x128xf32>
    %c13 = arith.constant 13 : index
    %118 = memref.load %arg1[%c13] : memref<52xf32, #tpu.memory_space<smem>>
    %c0_59 = arith.constant 0 : index
    %c1_60 = arith.constant 1 : index
    %c0_61 = arith.constant 0 : index
    %119 = vector.load %arg5[%c0_59, %c1_60, %c0_61] : memref<4x10x128xf32, #tpu.memory_space<vmem>>, vector<1x1x128xf32>
    %120 = vector.shape_cast %119 : vector<1x1x128xf32> to vector<1x128xf32>
    %121 = vector.broadcast %118 : f32 to vector<1x128xf32>
    %122 = arith.mulf %121, %120 : vector<1x128xf32>
    %123 = arith.addf %117, %122 : vector<1x128xf32>
    %c14 = arith.constant 14 : index
    %124 = memref.load %arg1[%c14] : memref<52xf32, #tpu.memory_space<smem>>
    %c0_62 = arith.constant 0 : index
    %c2_63 = arith.constant 2 : index
    %c0_64 = arith.constant 0 : index
    %125 = vector.load %arg5[%c0_62, %c2_63, %c0_64] : memref<4x10x128xf32, #tpu.memory_space<vmem>>, vector<1x1x128xf32>
    %126 = vector.shape_cast %125 : vector<1x1x128xf32> to vector<1x128xf32>
    %127 = vector.broadcast %124 : f32 to vector<1x128xf32>
    %128 = arith.mulf %127, %126 : vector<1x128xf32>
    %129 = arith.addf %123, %128 : vector<1x128xf32>
    %c15 = arith.constant 15 : index
    %130 = memref.load %arg1[%c15] : memref<52xf32, #tpu.memory_space<smem>>
    %c1_65 = arith.constant 1 : index
    %c0_66 = arith.constant 0 : index
    %c0_67 = arith.constant 0 : index
    %131 = vector.load %arg5[%c1_65, %c0_66, %c0_67] : memref<4x10x128xf32, #tpu.memory_space<vmem>>, vector<1x1x128xf32>
    %132 = vector.shape_cast %131 : vector<1x1x128xf32> to vector<1x128xf32>
    %133 = vector.broadcast %130 : f32 to vector<1x128xf32>
    %134 = arith.mulf %133, %132 : vector<1x128xf32>
    %135 = arith.addf %129, %134 : vector<1x128xf32>
    %c16 = arith.constant 16 : index
    %136 = memref.load %arg1[%c16] : memref<52xf32, #tpu.memory_space<smem>>
    %c1_68 = arith.constant 1 : index
    %c1_69 = arith.constant 1 : index
    %c0_70 = arith.constant 0 : index
    %137 = vector.load %arg5[%c1_68, %c1_69, %c0_70] : memref<4x10x128xf32, #tpu.memory_space<vmem>>, vector<1x1x128xf32>
    %138 = vector.shape_cast %137 : vector<1x1x128xf32> to vector<1x128xf32>
    %139 = vector.broadcast %136 : f32 to vector<1x128xf32>
    %140 = arith.mulf %139, %138 : vector<1x128xf32>
    %141 = arith.addf %135, %140 : vector<1x128xf32>
    %c17 = arith.constant 17 : index
    %142 = memref.load %arg1[%c17] : memref<52xf32, #tpu.memory_space<smem>>
    %c1_71 = arith.constant 1 : index
    %c2_72 = arith.constant 2 : index
    %c0_73 = arith.constant 0 : index
    %143 = vector.load %arg5[%c1_71, %c2_72, %c0_73] : memref<4x10x128xf32, #tpu.memory_space<vmem>>, vector<1x1x128xf32>
    %144 = vector.shape_cast %143 : vector<1x1x128xf32> to vector<1x128xf32>
    %145 = vector.broadcast %142 : f32 to vector<1x128xf32>
    %146 = arith.mulf %145, %144 : vector<1x128xf32>
    %147 = arith.addf %141, %146 : vector<1x128xf32>
    %c18 = arith.constant 18 : index
    %148 = memref.load %arg1[%c18] : memref<52xf32, #tpu.memory_space<smem>>
    %c2_74 = arith.constant 2 : index
    %c0_75 = arith.constant 0 : index
    %c0_76 = arith.constant 0 : index
    %149 = vector.load %arg5[%c2_74, %c0_75, %c0_76] : memref<4x10x128xf32, #tpu.memory_space<vmem>>, vector<1x1x128xf32>
    %150 = vector.shape_cast %149 : vector<1x1x128xf32> to vector<1x128xf32>
    %151 = vector.broadcast %148 : f32 to vector<1x128xf32>
    %152 = arith.mulf %151, %150 : vector<1x128xf32>
    %153 = arith.addf %147, %152 : vector<1x128xf32>
    %c19 = arith.constant 19 : index
    %154 = memref.load %arg1[%c19] : memref<52xf32, #tpu.memory_space<smem>>
    %c2_77 = arith.constant 2 : index
    %c1_78 = arith.constant 1 : index
    %c0_79 = arith.constant 0 : index
    %155 = vector.load %arg5[%c2_77, %c1_78, %c0_79] : memref<4x10x128xf32, #tpu.memory_space<vmem>>, vector<1x1x128xf32>
    %156 = vector.shape_cast %155 : vector<1x1x128xf32> to vector<1x128xf32>
    %157 = vector.broadcast %154 : f32 to vector<1x128xf32>
    %158 = arith.mulf %157, %156 : vector<1x128xf32>
    %159 = arith.addf %153, %158 : vector<1x128xf32>
    %c20 = arith.constant 20 : index
    %160 = memref.load %arg1[%c20] : memref<52xf32, #tpu.memory_space<smem>>
    %c2_80 = arith.constant 2 : index
    %c2_81 = arith.constant 2 : index
    %c0_82 = arith.constant 0 : index
    %161 = vector.load %arg5[%c2_80, %c2_81, %c0_82] : memref<4x10x128xf32, #tpu.memory_space<vmem>>, vector<1x1x128xf32>
    %162 = vector.shape_cast %161 : vector<1x1x128xf32> to vector<1x128xf32>
    %163 = vector.broadcast %160 : f32 to vector<1x128xf32>
    %164 = arith.mulf %163, %162 : vector<1x128xf32>
    %165 = arith.addf %159, %164 : vector<1x128xf32>
    %166 = math.tanh %165 : vector<1x128xf32>
    %cst_83 = arith.constant 0.000000e+00 : f32
    %167 = vector.broadcast %cst_83 : f32 to vector<1x128xf32>
    %cst_84 = arith.constant dense<0xFF800000> : vector<128xf32>
    %168 = vector.multi_reduction <maximumf>, %166, %cst_84 [0] : vector<1x128xf32> to vector<128xf32>
    %169 = vector.shape_cast %168 : vector<128xf32> to vector<1x128xf32>
    %c0_i32 = arith.constant 0 : i32
    %170 = vector.broadcast %c0_i32 : i32 to vector<1x128xi32>
    %171 = arith.cmpi eq, %109, %170 : vector<1x128xi32>
    %172 = arith.select %171, %169, %167 : vector<1x128xi1>, vector<1x128xf32>
    %c0_85 = arith.constant 0 : index
    %c0_86 = arith.constant 0 : index
    %c0_87 = arith.constant 0 : index
    %173 = vector.load %arg3[%c0_85, %c0_86, %c0_87] : memref<4x1x128xf32, #tpu.memory_space<vmem>>, vector<1x1x128xf32>
    %174 = vector.shape_cast %173 : vector<1x1x128xf32> to vector<1x128xf32>
    %175 = vector.shape_cast %172 : vector<1x128xf32> to vector<1x1x128xf32>
    tpu.vector_store %arg3[%c0_85, %c0_86, %c0_87], %175 {strides = array<i32>} : memref<4x1x128xf32, #tpu.memory_space<vmem>>, vector<1x1x128xf32>,
    %c49 = arith.constant 49 : index
    %176 = memref.load %arg1[%c49] : memref<52xf32, #tpu.memory_space<smem>>
    %177 = vector.broadcast %176 : f32 to vector<1x128xf32>
    %c21 = arith.constant 21 : index
    %178 = memref.load %arg1[%c21] : memref<52xf32, #tpu.memory_space<smem>>
    %c0_88 = arith.constant 0 : index
    %c0_89 = arith.constant 0 : index
    %c0_90 = arith.constant 0 : index
    %179 = vector.load %arg5[%c0_88, %c0_89, %c0_90] : memref<4x10x128xf32, #tpu.memory_space<vmem>>, vector<1x1x128xf32>
    %180 = vector.shape_cast %179 : vector<1x1x128xf32> to vector<1x128xf32>
    %181 = vector.broadcast %178 : f32 to vector<1x128xf32>
    %182 = arith.mulf %181, %180 : vector<1x128xf32>
    %183 = arith.addf %177, %182 : vector<1x128xf32>
    %c22 = arith.constant 22 : index
    %184 = memref.load %arg1[%c22] : memref<52xf32, #tpu.memory_space<smem>>
    %c0_91 = arith.constant 0 : index
    %c1_92 = arith.constant 1 : index
    %c0_93 = arith.constant 0 : index
    %185 = vector.load %arg5[%c0_91, %c1_92, %c0_93] : memref<4x10x128xf32, #tpu.memory_space<vmem>>, vector<1x1x128xf32>
    %186 = vector.shape_cast %185 : vector<1x1x128xf32> to vector<1x128xf32>
    %187 = vector.broadcast %184 : f32 to vector<1x128xf32>
    %188 = arith.mulf %187, %186 : vector<1x128xf32>
    %189 = arith.addf %183, %188 : vector<1x128xf32>
    %c23 = arith.constant 23 : index
    %190 = memref.load %arg1[%c23] : memref<52xf32, #tpu.memory_space<smem>>
    %c0_94 = arith.constant 0 : index
    %c2_95 = arith.constant 2 : index
    %c0_96 = arith.constant 0 : index
    %191 = vector.load %arg5[%c0_94, %c2_95, %c0_96] : memref<4x10x128xf32, #tpu.memory_space<vmem>>, vector<1x1x128xf32>
    %192 = vector.shape_cast %191 : vector<1x1x128xf32> to vector<1x128xf32>
    %193 = vector.broadcast %190 : f32 to vector<1x128xf32>
    %194 = arith.mulf %193, %192 : vector<1x128xf32>
    %195 = arith.addf %189, %194 : vector<1x128xf32>
    %c24 = arith.constant 24 : index
    %196 = memref.load %arg1[%c24] : memref<52xf32, #tpu.memory_space<smem>>
    %c1_97 = arith.constant 1 : index
    %c0_98 = arith.constant 0 : index
    %c0_99 = arith.constant 0 : index
    %197 = vector.load %arg5[%c1_97, %c0_98, %c0_99] : memref<4x10x128xf32, #tpu.memory_space<vmem>>, vector<1x1x128xf32>
    %198 = vector.shape_cast %197 : vector<1x1x128xf32> to vector<1x128xf32>
    %199 = vector.broadcast %196 : f32 to vector<1x128xf32>
    %200 = arith.mulf %199, %198 : vector<1x128xf32>
    %201 = arith.addf %195, %200 : vector<1x128xf32>
    %c25 = arith.constant 25 : index
    %202 = memref.load %arg1[%c25] : memref<52xf32, #tpu.memory_space<smem>>
    %c1_100 = arith.constant 1 : index
    %c1_101 = arith.constant 1 : index
    %c0_102 = arith.constant 0 : index
    %203 = vector.load %arg5[%c1_100, %c1_101, %c0_102] : memref<4x10x128xf32, #tpu.memory_space<vmem>>, vector<1x1x128xf32>
    %204 = vector.shape_cast %203 : vector<1x1x128xf32> to vector<1x128xf32>
    %205 = vector.broadcast %202 : f32 to vector<1x128xf32>
    %206 = arith.mulf %205, %204 : vector<1x128xf32>
    %207 = arith.addf %201, %206 : vector<1x128xf32>
    %c26 = arith.constant 26 : index
    %208 = memref.load %arg1[%c26] : memref<52xf32, #tpu.memory_space<smem>>
    %c1_103 = arith.constant 1 : index
    %c2_104 = arith.constant 2 : index
    %c0_105 = arith.constant 0 : index
    %209 = vector.load %arg5[%c1_103, %c2_104, %c0_105] : memref<4x10x128xf32, #tpu.memory_space<vmem>>, vector<1x1x128xf32>
    %210 = vector.shape_cast %209 : vector<1x1x128xf32> to vector<1x128xf32>
    %211 = vector.broadcast %208 : f32 to vector<1x128xf32>
    %212 = arith.mulf %211, %210 : vector<1x128xf32>
    %213 = arith.addf %207, %212 : vector<1x128xf32>
    %c27 = arith.constant 27 : index
    %214 = memref.load %arg1[%c27] : memref<52xf32, #tpu.memory_space<smem>>
    %c2_106 = arith.constant 2 : index
    %c0_107 = arith.constant 0 : index
    %c0_108 = arith.constant 0 : index
    %215 = vector.load %arg5[%c2_106, %c0_107, %c0_108] : memref<4x10x128xf32, #tpu.memory_space<vmem>>, vector<1x1x128xf32>
    %216 = vector.shape_cast %215 : vector<1x1x128xf32> to vector<1x128xf32>
    %217 = vector.broadcast %214 : f32 to vector<1x128xf32>
    %218 = arith.mulf %217, %216 : vector<1x128xf32>
    %219 = arith.addf %213, %218 : vector<1x128xf32>
    %c28 = arith.constant 28 : index
    %220 = memref.load %arg1[%c28] : memref<52xf32, #tpu.memory_space<smem>>
    %c2_109 = arith.constant 2 : index
    %c1_110 = arith.constant 1 : index
    %c0_111 = arith.constant 0 : index
    %221 = vector.load %arg5[%c2_109, %c1_110, %c0_111] : memref<4x10x128xf32, #tpu.memory_space<vmem>>, vector<1x1x128xf32>
    %222 = vector.shape_cast %221 : vector<1x1x128xf32> to vector<1x128xf32>
    %223 = vector.broadcast %220 : f32 to vector<1x128xf32>
    %224 = arith.mulf %223, %222 : vector<1x128xf32>
    %225 = arith.addf %219, %224 : vector<1x128xf32>
    %c29 = arith.constant 29 : index
    %226 = memref.load %arg1[%c29] : memref<52xf32, #tpu.memory_space<smem>>
    %c2_112 = arith.constant 2 : index
    %c2_113 = arith.constant 2 : index
    %c0_114 = arith.constant 0 : index
    %227 = vector.load %arg5[%c2_112, %c2_113, %c0_114] : memref<4x10x128xf32, #tpu.memory_space<vmem>>, vector<1x1x128xf32>
    %228 = vector.shape_cast %227 : vector<1x1x128xf32> to vector<1x128xf32>
    %229 = vector.broadcast %226 : f32 to vector<1x128xf32>
    %230 = arith.mulf %229, %228 : vector<1x128xf32>
    %231 = arith.addf %225, %230 : vector<1x128xf32>
    %232 = math.tanh %231 : vector<1x128xf32>
    %cst_115 = arith.constant 0.000000e+00 : f32
    %233 = vector.broadcast %cst_115 : f32 to vector<1x128xf32>
    %cst_116 = arith.constant dense<0xFF800000> : vector<128xf32>
    %234 = vector.multi_reduction <maximumf>, %232, %cst_116 [0] : vector<1x128xf32> to vector<128xf32>
    %235 = vector.shape_cast %234 : vector<128xf32> to vector<1x128xf32>
    %c0_i32_117 = arith.constant 0 : i32
    %236 = vector.broadcast %c0_i32_117 : i32 to vector<1x128xi32>
    %237 = arith.cmpi eq, %109, %236 : vector<1x128xi32>
    %238 = arith.select %237, %235, %233 : vector<1x128xi1>, vector<1x128xf32>
    %c1_118 = arith.constant 1 : index
    %c0_119 = arith.constant 0 : index
    %c0_120 = arith.constant 0 : index
    %239 = vector.load %arg3[%c1_118, %c0_119, %c0_120] : memref<4x1x128xf32, #tpu.memory_space<vmem>>, vector<1x1x128xf32>
    %240 = vector.shape_cast %239 : vector<1x1x128xf32> to vector<1x128xf32>
    %241 = vector.shape_cast %238 : vector<1x128xf32> to vector<1x1x128xf32>
    tpu.vector_store %arg3[%c1_118, %c0_119, %c0_120], %241 {strides = array<i32>} : memref<4x1x128xf32, #tpu.memory_space<vmem>>, vector<1x1x128xf32>,
    %c50 = arith.constant 50 : index
    %242 = memref.load %arg1[%c50] : memref<52xf32, #tpu.memory_space<smem>>
    %243 = vector.broadcast %242 : f32 to vector<1x128xf32>
    %c30 = arith.constant 30 : index
    %244 = memref.load %arg1[%c30] : memref<52xf32, #tpu.memory_space<smem>>
    %c0_121 = arith.constant 0 : index
    %c0_122 = arith.constant 0 : index
    %c0_123 = arith.constant 0 : index
    %245 = vector.load %arg5[%c0_121, %c0_122, %c0_123] : memref<4x10x128xf32, #tpu.memory_space<vmem>>, vector<1x1x128xf32>
    %246 = vector.shape_cast %245 : vector<1x1x128xf32> to vector<1x128xf32>
    %247 = vector.broadcast %244 : f32 to vector<1x128xf32>
    %248 = arith.mulf %247, %246 : vector<1x128xf32>
    %249 = arith.addf %243, %248 : vector<1x128xf32>
    %c31 = arith.constant 31 : index
    %250 = memref.load %arg1[%c31] : memref<52xf32, #tpu.memory_space<smem>>
    %c0_124 = arith.constant 0 : index
    %c1_125 = arith.constant 1 : index
    %c0_126 = arith.constant 0 : index
    %251 = vector.load %arg5[%c0_124, %c1_125, %c0_126] : memref<4x10x128xf32, #tpu.memory_space<vmem>>, vector<1x1x128xf32>
    %252 = vector.shape_cast %251 : vector<1x1x128xf32> to vector<1x128xf32>
    %253 = vector.broadcast %250 : f32 to vector<1x128xf32>
    %254 = arith.mulf %253, %252 : vector<1x128xf32>
    %255 = arith.addf %249, %254 : vector<1x128xf32>
    %c32 = arith.constant 32 : index
    %256 = memref.load %arg1[%c32] : memref<52xf32, #tpu.memory_space<smem>>
    %c0_127 = arith.constant 0 : index
    %c2_128 = arith.constant 2 : index
    %c0_129 = arith.constant 0 : index
    %257 = vector.load %arg5[%c0_127, %c2_128, %c0_129] : memref<4x10x128xf32, #tpu.memory_space<vmem>>, vector<1x1x128xf32>
    %258 = vector.shape_cast %257 : vector<1x1x128xf32> to vector<1x128xf32>
    %259 = vector.broadcast %256 : f32 to vector<1x128xf32>
    %260 = arith.mulf %259, %258 : vector<1x128xf32>
    %261 = arith.addf %255, %260 : vector<1x128xf32>
    %c33 = arith.constant 33 : index
    %262 = memref.load %arg1[%c33] : memref<52xf32, #tpu.memory_space<smem>>
    %c1_130 = arith.constant 1 : index
    %c0_131 = arith.constant 0 : index
    %c0_132 = arith.constant 0 : index
    %263 = vector.load %arg5[%c1_130, %c0_131, %c0_132] : memref<4x10x128xf32, #tpu.memory_space<vmem>>, vector<1x1x128xf32>
    %264 = vector.shape_cast %263 : vector<1x1x128xf32> to vector<1x128xf32>
    %265 = vector.broadcast %262 : f32 to vector<1x128xf32>
    %266 = arith.mulf %265, %264 : vector<1x128xf32>
    %267 = arith.addf %261, %266 : vector<1x128xf32>
    %c34 = arith.constant 34 : index
    %268 = memref.load %arg1[%c34] : memref<52xf32, #tpu.memory_space<smem>>
    %c1_133 = arith.constant 1 : index
    %c1_134 = arith.constant 1 : index
    %c0_135 = arith.constant 0 : index
    %269 = vector.load %arg5[%c1_133, %c1_134, %c0_135] : memref<4x10x128xf32, #tpu.memory_space<vmem>>, vector<1x1x128xf32>
    %270 = vector.shape_cast %269 : vector<1x1x128xf32> to vector<1x128xf32>
    %271 = vector.broadcast %268 : f32 to vector<1x128xf32>
    %272 = arith.mulf %271, %270 : vector<1x128xf32>
    %273 = arith.addf %267, %272 : vector<1x128xf32>
    %c35 = arith.constant 35 : index
    %274 = memref.load %arg1[%c35] : memref<52xf32, #tpu.memory_space<smem>>
    %c1_136 = arith.constant 1 : index
    %c2_137 = arith.constant 2 : index
    %c0_138 = arith.constant 0 : index
    %275 = vector.load %arg5[%c1_136, %c2_137, %c0_138] : memref<4x10x128xf32, #tpu.memory_space<vmem>>, vector<1x1x128xf32>
    %276 = vector.shape_cast %275 : vector<1x1x128xf32> to vector<1x128xf32>
    %277 = vector.broadcast %274 : f32 to vector<1x128xf32>
    %278 = arith.mulf %277, %276 : vector<1x128xf32>
    %279 = arith.addf %273, %278 : vector<1x128xf32>
    %c36 = arith.constant 36 : index
    %280 = memref.load %arg1[%c36] : memref<52xf32, #tpu.memory_space<smem>>
    %c2_139 = arith.constant 2 : index
    %c0_140 = arith.constant 0 : index
    %c0_141 = arith.constant 0 : index
    %281 = vector.load %arg5[%c2_139, %c0_140, %c0_141] : memref<4x10x128xf32, #tpu.memory_space<vmem>>, vector<1x1x128xf32>
    %282 = vector.shape_cast %281 : vector<1x1x128xf32> to vector<1x128xf32>
    %283 = vector.broadcast %280 : f32 to vector<1x128xf32>
    %284 = arith.mulf %283, %282 : vector<1x128xf32>
    %285 = arith.addf %279, %284 : vector<1x128xf32>
    %c37 = arith.constant 37 : index
    %286 = memref.load %arg1[%c37] : memref<52xf32, #tpu.memory_space<smem>>
    %c2_142 = arith.constant 2 : index
    %c1_143 = arith.constant 1 : index
    %c0_144 = arith.constant 0 : index
    %287 = vector.load %arg5[%c2_142, %c1_143, %c0_144] : memref<4x10x128xf32, #tpu.memory_space<vmem>>, vector<1x1x128xf32>
    %288 = vector.shape_cast %287 : vector<1x1x128xf32> to vector<1x128xf32>
    %289 = vector.broadcast %286 : f32 to vector<1x128xf32>
    %290 = arith.mulf %289, %288 : vector<1x128xf32>
    %291 = arith.addf %285, %290 : vector<1x128xf32>
    %c38 = arith.constant 38 : index
    %292 = memref.load %arg1[%c38] : memref<52xf32, #tpu.memory_space<smem>>
    %c2_145 = arith.constant 2 : index
    %c2_146 = arith.constant 2 : index
    %c0_147 = arith.constant 0 : index
    %293 = vector.load %arg5[%c2_145, %c2_146, %c0_147] : memref<4x10x128xf32, #tpu.memory_space<vmem>>, vector<1x1x128xf32>
    %294 = vector.shape_cast %293 : vector<1x1x128xf32> to vector<1x128xf32>
    %295 = vector.broadcast %292 : f32 to vector<1x128xf32>
    %296 = arith.mulf %295, %294 : vector<1x128xf32>
    %297 = arith.addf %291, %296 : vector<1x128xf32>
    %298 = math.tanh %297 : vector<1x128xf32>
    %cst_148 = arith.constant 0.000000e+00 : f32
    %299 = vector.broadcast %cst_148 : f32 to vector<1x128xf32>
    %cst_149 = arith.constant dense<0xFF800000> : vector<128xf32>
    %300 = vector.multi_reduction <maximumf>, %298, %cst_149 [0] : vector<1x128xf32> to vector<128xf32>
    %301 = vector.shape_cast %300 : vector<128xf32> to vector<1x128xf32>
    %c0_i32_150 = arith.constant 0 : i32
    %302 = vector.broadcast %c0_i32_150 : i32 to vector<1x128xi32>
    %303 = arith.cmpi eq, %109, %302 : vector<1x128xi32>
    %304 = arith.select %303, %301, %299 : vector<1x128xi1>, vector<1x128xf32>
    %c2_151 = arith.constant 2 : index
    %c0_152 = arith.constant 0 : index
    %c0_153 = arith.constant 0 : index
    %305 = vector.load %arg3[%c2_151, %c0_152, %c0_153] : memref<4x1x128xf32, #tpu.memory_space<vmem>>, vector<1x1x128xf32>
    %306 = vector.shape_cast %305 : vector<1x1x128xf32> to vector<1x128xf32>
    %307 = vector.shape_cast %304 : vector<1x128xf32> to vector<1x1x128xf32>
    tpu.vector_store %arg3[%c2_151, %c0_152, %c0_153], %307 {strides = array<i32>} : memref<4x1x128xf32, #tpu.memory_space<vmem>>, vector<1x1x128xf32>,
    %c51 = arith.constant 51 : index
    %308 = memref.load %arg1[%c51] : memref<52xf32, #tpu.memory_space<smem>>
    %309 = vector.broadcast %308 : f32 to vector<1x128xf32>
    %c39 = arith.constant 39 : index
    %310 = memref.load %arg1[%c39] : memref<52xf32, #tpu.memory_space<smem>>
    %c0_154 = arith.constant 0 : index
    %c0_155 = arith.constant 0 : index
    %c0_156 = arith.constant 0 : index
    %311 = vector.load %arg5[%c0_154, %c0_155, %c0_156] : memref<4x10x128xf32, #tpu.memory_space<vmem>>, vector<1x1x128xf32>
    %312 = vector.shape_cast %311 : vector<1x1x128xf32> to vector<1x128xf32>
    %313 = vector.broadcast %310 : f32 to vector<1x128xf32>
    %314 = arith.mulf %313, %312 : vector<1x128xf32>
    %315 = arith.addf %309, %314 : vector<1x128xf32>
    %c40 = arith.constant 40 : index
    %316 = memref.load %arg1[%c40] : memref<52xf32, #tpu.memory_space<smem>>
    %c0_157 = arith.constant 0 : index
    %c1_158 = arith.constant 1 : index
    %c0_159 = arith.constant 0 : index
    %317 = vector.load %arg5[%c0_157, %c1_158, %c0_159] : memref<4x10x128xf32, #tpu.memory_space<vmem>>, vector<1x1x128xf32>
    %318 = vector.shape_cast %317 : vector<1x1x128xf32> to vector<1x128xf32>
    %319 = vector.broadcast %316 : f32 to vector<1x128xf32>
    %320 = arith.mulf %319, %318 : vector<1x128xf32>
    %321 = arith.addf %315, %320 : vector<1x128xf32>
    %c41 = arith.constant 41 : index
    %322 = memref.load %arg1[%c41] : memref<52xf32, #tpu.memory_space<smem>>
    %c0_160 = arith.constant 0 : index
    %c2_161 = arith.constant 2 : index
    %c0_162 = arith.constant 0 : index
    %323 = vector.load %arg5[%c0_160, %c2_161, %c0_162] : memref<4x10x128xf32, #tpu.memory_space<vmem>>, vector<1x1x128xf32>
    %324 = vector.shape_cast %323 : vector<1x1x128xf32> to vector<1x128xf32>
    %325 = vector.broadcast %322 : f32 to vector<1x128xf32>
    %326 = arith.mulf %325, %324 : vector<1x128xf32>
    %327 = arith.addf %321, %326 : vector<1x128xf32>
    %c42 = arith.constant 42 : index
    %328 = memref.load %arg1[%c42] : memref<52xf32, #tpu.memory_space<smem>>
    %c1_163 = arith.constant 1 : index
    %c0_164 = arith.constant 0 : index
    %c0_165 = arith.constant 0 : index
    %329 = vector.load %arg5[%c1_163, %c0_164, %c0_165] : memref<4x10x128xf32, #tpu.memory_space<vmem>>, vector<1x1x128xf32>
    %330 = vector.shape_cast %329 : vector<1x1x128xf32> to vector<1x128xf32>
    %331 = vector.broadcast %328 : f32 to vector<1x128xf32>
    %332 = arith.mulf %331, %330 : vector<1x128xf32>
    %333 = arith.addf %327, %332 : vector<1x128xf32>
    %c43 = arith.constant 43 : index
    %334 = memref.load %arg1[%c43] : memref<52xf32, #tpu.memory_space<smem>>
    %c1_166 = arith.constant 1 : index
    %c1_167 = arith.constant 1 : index
    %c0_168 = arith.constant 0 : index
    %335 = vector.load %arg5[%c1_166, %c1_167, %c0_168] : memref<4x10x128xf32, #tpu.memory_space<vmem>>, vector<1x1x128xf32>
    %336 = vector.shape_cast %335 : vector<1x1x128xf32> to vector<1x128xf32>
    %337 = vector.broadcast %334 : f32 to vector<1x128xf32>
    %338 = arith.mulf %337, %336 : vector<1x128xf32>
    %339 = arith.addf %333, %338 : vector<1x128xf32>
    %c44 = arith.constant 44 : index
    %340 = memref.load %arg1[%c44] : memref<52xf32, #tpu.memory_space<smem>>
    %c1_169 = arith.constant 1 : index
    %c2_170 = arith.constant 2 : index
    %c0_171 = arith.constant 0 : index
    %341 = vector.load %arg5[%c1_169, %c2_170, %c0_171] : memref<4x10x128xf32, #tpu.memory_space<vmem>>, vector<1x1x128xf32>
    %342 = vector.shape_cast %341 : vector<1x1x128xf32> to vector<1x128xf32>
    %343 = vector.broadcast %340 : f32 to vector<1x128xf32>
    %344 = arith.mulf %343, %342 : vector<1x128xf32>
    %345 = arith.addf %339, %344 : vector<1x128xf32>
    %c45 = arith.constant 45 : index
    %346 = memref.load %arg1[%c45] : memref<52xf32, #tpu.memory_space<smem>>
    %c2_172 = arith.constant 2 : index
    %c0_173 = arith.constant 0 : index
    %c0_174 = arith.constant 0 : index
    %347 = vector.load %arg5[%c2_172, %c0_173, %c0_174] : memref<4x10x128xf32, #tpu.memory_space<vmem>>, vector<1x1x128xf32>
    %348 = vector.shape_cast %347 : vector<1x1x128xf32> to vector<1x128xf32>
    %349 = vector.broadcast %346 : f32 to vector<1x128xf32>
    %350 = arith.mulf %349, %348 : vector<1x128xf32>
    %351 = arith.addf %345, %350 : vector<1x128xf32>
    %c46 = arith.constant 46 : index
    %352 = memref.load %arg1[%c46] : memref<52xf32, #tpu.memory_space<smem>>
    %c2_175 = arith.constant 2 : index
    %c1_176 = arith.constant 1 : index
    %c0_177 = arith.constant 0 : index
    %353 = vector.load %arg5[%c2_175, %c1_176, %c0_177] : memref<4x10x128xf32, #tpu.memory_space<vmem>>, vector<1x1x128xf32>
    %354 = vector.shape_cast %353 : vector<1x1x128xf32> to vector<1x128xf32>
    %355 = vector.broadcast %352 : f32 to vector<1x128xf32>
    %356 = arith.mulf %355, %354 : vector<1x128xf32>
    %357 = arith.addf %351, %356 : vector<1x128xf32>
    %c47 = arith.constant 47 : index
    %358 = memref.load %arg1[%c47] : memref<52xf32, #tpu.memory_space<smem>>
    %c2_178 = arith.constant 2 : index
    %c2_179 = arith.constant 2 : index
    %c0_180 = arith.constant 0 : index
    %359 = vector.load %arg5[%c2_178, %c2_179, %c0_180] : memref<4x10x128xf32, #tpu.memory_space<vmem>>, vector<1x1x128xf32>
    %360 = vector.shape_cast %359 : vector<1x1x128xf32> to vector<1x128xf32>
    %361 = vector.broadcast %358 : f32 to vector<1x128xf32>
    %362 = arith.mulf %361, %360 : vector<1x128xf32>
    %363 = arith.addf %357, %362 : vector<1x128xf32>
    %364 = math.tanh %363 : vector<1x128xf32>
    %cst_181 = arith.constant 0.000000e+00 : f32
    %365 = vector.broadcast %cst_181 : f32 to vector<1x128xf32>
    %cst_182 = arith.constant dense<0xFF800000> : vector<128xf32>
    %366 = vector.multi_reduction <maximumf>, %364, %cst_182 [0] : vector<1x128xf32> to vector<128xf32>
    %367 = vector.shape_cast %366 : vector<128xf32> to vector<1x128xf32>
    %c0_i32_183 = arith.constant 0 : i32
    %368 = vector.broadcast %c0_i32_183 : i32 to vector<1x128xi32>
    %369 = arith.cmpi eq, %109, %368 : vector<1x128xi32>
    %370 = arith.select %369, %367, %365 : vector<1x128xi1>, vector<1x128xf32>
    %c3_184 = arith.constant 3 : index
    %c0_185 = arith.constant 0 : index
    %c0_186 = arith.constant 0 : index
    %371 = vector.load %arg3[%c3_184, %c0_185, %c0_186] : memref<4x1x128xf32, #tpu.memory_space<vmem>>, vector<1x1x128xf32>
    %372 = vector.shape_cast %371 : vector<1x1x128xf32> to vector<1x128xf32>
    %373 = vector.shape_cast %370 : vector<1x128xf32> to vector<1x1x128xf32>
    tpu.vector_store %arg3[%c3_184, %c0_185, %c0_186], %373 {strides = array<i32>} : memref<4x1x128xf32, #tpu.memory_space<vmem>>, vector<1x1x128xf32>,
    return
  }
  func.func @transform_0(%arg0: i32) -> i32 {
    %c0_i32 = arith.constant 0 : i32
    %c0_i32_0 = arith.constant 0 : i32
    return %c0_i32 : i32
  }
  func.func @transform_1(%arg0: i32) -> (i32, i32) {
    %c0_i32 = arith.constant 0 : i32
    %c0_i32_0 = arith.constant 0 : i32
    return %c0_i32, %arg0 : i32, i32
  }
  func.func @transform_2(%arg0: i32) -> (i32, i32, i32) {
    %c0_i32 = arith.constant 0 : i32
    %c0_i32_0 = arith.constant 0 : i32
    %c0_i32_1 = arith.constant 0 : i32
    return %c0_i32, %c0_i32_0, %arg0 : i32, i32, i32
  }
}

</mosaic_0001>

<llo_original>
// kernel: tpu_custom_call.1
$region0: #{tpu_custom_call.1}
  #allocation0 [shape = 'u32[]', space=smem, size = 0x4, offset = 0x4, fixed_abs, tag = 'smem constant byte address 0x4 - core index']
  #allocation1 [shape = 'u32[72,128]{1,0:T(1,128)}', space=vmem, size = 0x9000, scoped, tag = 'internal scratch']
  #allocation2 [shape = 'f32[4,10,128]{2,1,0:T(8,128)}', space=vmem, size = 0x8000, scoped, tag = 'scratch operand']
  #allocation3 [shape = 'f32[4,10,128]{2,1,0:T(8,128)}', space=vmem, size = 0x8000, scoped, tag = 'scratch operand']
  %s0 = inlined_call_operand.hbm [shape: f32[52], index: 0, kind: input, shape index: {}]
  %s1 = inlined_call_operand.hbm [shape: f32[8,128], index: 1, kind: input, shape index: {}]
  %s2 = inlined_call_operand.hbm [shape: f32[4,1,128], index: 2, kind: output, shape index: {}]
  %s3 = sld [smem:[#allocation0]]
  $region26: #{tpu_custom_call.1} parent=0
    _
  %s5 = ssub.s32 1, %s3
  %s6 = scalar_select 0, %s5, %s3
  $region1: #{tpu_custom_call.1} parent=0
    #allocation4 [shape = 'u8[512]{0}', space=smem, size = 0x200, scoped, tag = 'input window, operand 0, single buffered']
    #allocation5 [shape = 's32[1]{0}', space=sflag, size = 0x4, scoped, tag = 'scoped memory for tpu_custom_call.1']
    #allocation6 [shape = 's32[1]{0}', space=sflag, size = 0x4, scoped, tag = 'scoped memory for tpu_custom_call.1']
    #allocation7 [shape = 's32[1]{0}', space=sflag, size = 0x4, scoped, tag = 'scoped memory for tpu_custom_call.1']
    #allocation8 [shape = 'u8[4096]{0}', space=vmem, size = 0x1000, scoped, tag = 'input window, operand 1, single buffered']
    #allocation9 [shape = 'u8[2048]{0}', space=vmem, size = 0x800, scoped, tag = 'output window, operand 0, single buffered']
    %7 = vsyncpa [#allocation7], 0
    %8 = vsyncpa [#allocation5], 0
    %9 = vsyncpa [#allocation6], 0
    // Predicated region
    $region2: #{tpu_custom_call.1} parent=1 // pred_check
      _
    $region3: #{tpu_custom_call.1} parent=1 // pred_check_branch
      %11 = sbr.rel (0) target = $region5
    $region4: #{tpu_custom_call.1} parent=1 // pred_region
      %13 = vsyncadd [#allocation7], 0
      %s15 = sshll.u32 %s0, 4
      %s16 = int_to_ptr.hbm [resolvable:$true] %s15
      %18 = dma.hbm_to_smem %s16, 16, [#allocation4], [#allocation7]
    $region5: #{tpu_custom_call.1} parent=1 // pred_fallthru
      _
    // Predicated region
    $region6: #{tpu_custom_call.1} parent=1 // pred_check
      _
    $region7: #{tpu_custom_call.1} parent=1 // pred_check_branch
      %20 = sbr.rel (0) target = $region9
    $region8: #{tpu_custom_call.1} parent=1 // pred_region
      %22 = vsyncadd [#allocation5], 0
      %s24 = sshll.u32 %s1, 4
      %s25 = int_to_ptr.hbm [resolvable:$true] %s24
      %s26 = sshll.u32 [#allocation8], 4
      %s27 = int_to_ptr.vmem [resolvable:$true] %s26
      %29 = dma.hbm_to_vmem [thread:$0]  %s25, 128, %s27, [#allocation5]
    $region9: #{tpu_custom_call.1} parent=1 // pred_fallthru
      _
    // Predicated region
    $region10: #{tpu_custom_call.1} parent=1 // pred_check
      _
    $region11: #{tpu_custom_call.1} parent=1 // pred_check_branch
      %31 = sbr.rel (0) target = $region13
    $region12: #{tpu_custom_call.1} parent=1 // pred_region
      %33 = dma.done [#allocation7], 16
    $region13: #{tpu_custom_call.1} parent=1 // pred_fallthru
      _
    // Predicated region
    $region14: #{tpu_custom_call.1} parent=1 // pred_check
      _
    $region15: #{tpu_custom_call.1} parent=1 // pred_check_branch
      %35 = sbr.rel (0) target = $region17
    $region16: #{tpu_custom_call.1} parent=1 // pred_region
      %37 = dma.done [#allocation5], 128
    $region17: #{tpu_custom_call.1} parent=1 // pred_fallthru
      _
    %38 = sfence
    %39 = vst [vmem:[#allocation2] sm:$0x1] 0.0
    %v40 = vld [vmem:[#allocation8] sm:$0xff]
    %41 = vst [vmem:[#allocation2 + $0x1] sm:$0xff] %v40
    %42 = vst [vmem:[#allocation2 + $0x9] sm:$0x1] 0.0
    %v43 = vlaneseq
    %v44 = vshrl.u32 %v43, 7
    %s45 = sld [smem:[#allocation4 + $0x9]]
    %v46 = vstv %s45
    %s47 = sld [smem:[#allocation4]]
    %v48 = vld [vmem:[#allocation2] sm:$0xff]
    %v49 = vstv %s47
    %v50 = vmul.f32 %v49, %v48
    %v51 = vadd.f32 %v46, %v50
    %s52 = sld [smem:[#allocation4 + $0x1]]
    %v53 = vld [vmem:[#allocation2 + $0x1] sm:$0xff]
    %v54 = vstv %s52
    %v55 = vmul.f32 %v54, %v53
    %v56 = vadd.f32 %v51, %v55
    %s57 = sld [smem:[#allocation4 + $0x2]]
    %v58 = vld [vmem:[#allocation2 + $0x2] sm:$0xff]
    %v59 = vstv %s57
    %v60 = vmul.f32 %v59, %v58
    %v61 = vadd.f32 %v56, %v60
    %v62 = vtanh.pop %v61
    %v63 = vrot.slane %v62, 4
    %v64 = vmax.f32 %v62, %v63
    %v65 = vrot.slane %v64, 2
    %v66 = vmax.f32 %v64, %v65
    %v67 = vrot.slane %v66, 1
    %v68 = vmax.f32 %v66, %v67
    %vm69 = vcmp.eq.s32.totalorder %v44, 1
    %v70 = vsel %vm69, %v68, 0.0
    %71 = vst [vmem:[#allocation3] sm:$0x7] %v70
    %s72 = sld [smem:[#allocation4 + $0xa]]
    %v73 = vstv %s72
    %s74 = sld [smem:[#allocation4 + $0x3]]
    %v75 = vld [vmem:[#allocation2] sm:$0xff]
    %v76 = vstv %s74
    %v77 = vmul.f32 %v76, %v75
    %v78 = vadd.f32 %v73, %v77
    %s79 = sld [smem:[#allocation4 + $0x4]]
    %v80 = vld [vmem:[#allocation2 + $0x1] sm:$0xff]
    %v81 = vstv %s79
    %v82 = vmul.f32 %v81, %v80
    %v83 = vadd.f32 %v78, %v82
    %s84 = sld [smem:[#allocation4 + $0x5]]
    %v85 = vld [vmem:[#allocation2 + $0x2] sm:$0xff]
    %v86 = vstv %s84
    %v87 = vmul.f32 %v86, %v85
    %v88 = vadd.f32 %v83, %v87
    %v89 = vtanh.pop %v88
    %v90 = vrot.slane %v89, 4
    %v91 = vmax.f32 %v89, %v90
    %v92 = vrot.slane %v91, 2
    %v93 = vmax.f32 %v91, %v92
    %v94 = vrot.slane %v93, 1
    %v95 = vmax.f32 %v93, %v94
    %v96 = vsel %vm69, %v95, 0.0
    %s97 = scalar_lea.vmem [#allocation3], 16
    %98 = vst [vmem:[%s97] sm:$0x7] %v96
    %s99 = sld [smem:[#allocation4 + $0xb]]
    %v100 = vstv %s99
    %s101 = sld [smem:[#allocation4 + $0x6]]
    %v102 = vld [vmem:[#allocation2] sm:$0xff]
    %v103 = vstv %s101
    %v104 = vmul.f32 %v103, %v102
    %v105 = vadd.f32 %v100, %v104
    %s106 = sld [smem:[#allocation4 + $0x7]]
    %v107 = vld [vmem:[#allocation2 + $0x1] sm:$0xff]
    %v108 = vstv %s106
    %v109 = vmul.f32 %v108, %v107
    %v110 = vadd.f32 %v105, %v109
    %s111 = sld [smem:[#allocation4 + $0x8]]
    %v112 = vld [vmem:[#allocation2 + $0x2] sm:$0xff]
    %v113 = vstv %s111
    %v114 = vmul.f32 %v113, %v112
    %v115 = vadd.f32 %v110, %v114
    %v116 = vtanh.pop %v115
    %v117 = vrot.slane %v116, 4
    %v118 = vmax.f32 %v116, %v117
    %v119 = vrot.slane %v118, 2
    %v120 = vmax.f32 %v118, %v119
    %v121 = vrot.slane %v120, 1
    %v122 = vmax.f32 %v120, %v121
    %v123 = vsel %vm69, %v122, 0.0
    %s124 = scalar_lea.vmem [#allocation3], 32
    %125 = vst [vmem:[%s124] sm:$0x7] %v123
    %s126 = sld [smem:[#allocation4 + $0x30]]
    %v127 = vstv %s126
    %s128 = sld [smem:[#allocation4 + $0xc]]
    %v129 = vld [vmem:[#allocation3] sm:$0x1]
    %v130 = vstv %s128
    %v131 = vmul.f32 %v130, %v129
    %v132 = vadd.f32 %v127, %v131
    %s133 = sld [smem:[#allocation4 + $0xd]]
    %v134 = vld [vmem:[#allocation3 + $0x1] sm:$0x1]
    %v135 = vstv %s133
    %v136 = vmul.f32 %v135, %v134
    %v137 = vadd.f32 %v132, %v136
    %s138 = sld [smem:[#allocation4 + $0xe]]
    %v139 = vld [vmem:[#allocation3 + $0x2] sm:$0x1]
    %v140 = vstv %s138
    %v141 = vmul.f32 %v140, %v139
    %v142 = vadd.f32 %v137, %v141
    %s143 = sld [smem:[#allocation4 + $0xf]]
    %v144 = vld [vmem:[%s97] sm:$0x1]
    %v145 = vstv %s143
    %v146 = vmul.f32 %v145, %v144
    %v147 = vadd.f32 %v142, %v146
    %s148 = sld [smem:[#allocation4 + $0x10]]
    %v149 = vld [vmem:[%s97 + $0x1] sm:$0x1]
    %v150 = vstv %s148
    %v151 = vmul.f32 %v150, %v149
    %v152 = vadd.f32 %v147, %v151
    %s153 = sld [smem:[#allocation4 + $0x11]]
    %v154 = vld [vmem:[%s97 + $0x2] sm:$0x1]
    %v155 = vstv %s153
    %v156 = vmul.f32 %v155, %v154
    %v157 = vadd.f32 %v152, %v156
    %s158 = sld [smem:[#allocation4 + $0x12]]
    %v159 = vld [vmem:[%s124] sm:$0x1]
    %v160 = vstv %s158
    %v161 = vmul.f32 %v160, %v159
    %v162 = vadd.f32 %v157, %v161
    %s163 = sld [smem:[#allocation4 + $0x13]]
    %v164 = vld [vmem:[%s124 + $0x1] sm:$0x1]
    %v165 = vstv %s163
    %v166 = vmul.f32 %v165, %v164
    %v167 = vadd.f32 %v162, %v166
    %s168 = sld [smem:[#allocation4 + $0x14]]
    %v169 = vld [vmem:[%s124 + $0x2] sm:$0x1]
    %v170 = vstv %s168
    %v171 = vmul.f32 %v170, %v169
    %v172 = vadd.f32 %v167, %v171
    %v173 = vtanh.pop %v172
    %vm174 = vcmp.eq.s32.totalorder %v44, 0
    %v175 = vsel %vm174, %v173, 0.0
    %176 = vst [vmem:[#allocation9] sm:$0x1] %v175
    %s177 = sld [smem:[#allocation4 + $0x31]]
    %v178 = vstv %s177
    %s179 = sld [smem:[#allocation4 + $0x15]]
    %v180 = vld [vmem:[#allocation3] sm:$0x1]
    %v181 = vstv %s179
    %v182 = vmul.f32 %v181, %v180
    %v183 = vadd.f32 %v178, %v182
    %s184 = sld [smem:[#allocation4 + $0x16]]
    %v185 = vld [vmem:[#allocation3 + $0x1] sm:$0x1]
    %v186 = vstv %s184
    %v187 = vmul.f32 %v186, %v185
    %v188 = vadd.f32 %v183, %v187
    %s189 = sld [smem:[#allocation4 + $0x17]]
    %v190 = vld [vmem:[#allocation3 + $0x2] sm:$0x1]
    %v191 = vstv %s189
    %v192 = vmul.f32 %v191, %v190
    %v193 = vadd.f32 %v188, %v192
    %s194 = sld [smem:[#allocation4 + $0x18]]
    %v195 = vld [vmem:[%s97] sm:$0x1]
    %v196 = vstv %s194
    %v197 = vmul.f32 %v196, %v195
    %v198 = vadd.f32 %v193, %v197
    %s199 = sld [smem:[#allocation4 + $0x19]]
    %v200 = vld [vmem:[%s97 + $0x1] sm:$0x1]
    %v201 = vstv %s199
    %v202 = vmul.f32 %v201, %v200
    %v203 = vadd.f32 %v198, %v202
    %s204 = sld [smem:[#allocation4 + $0x1a]]
    %v205 = vld [vmem:[%s97 + $0x2] sm:$0x1]
    %v206 = vstv %s204
    %v207 = vmul.f32 %v206, %v205
    %v208 = vadd.f32 %v203, %v207
    %s209 = sld [smem:[#allocation4 + $0x1b]]
    %v210 = vld [vmem:[%s124] sm:$0x1]
    %v211 = vstv %s209
    %v212 = vmul.f32 %v211, %v210
    %v213 = vadd.f32 %v208, %v212
    %s214 = sld [smem:[#allocation4 + $0x1c]]
    %v215 = vld [vmem:[%s124 + $0x1] sm:$0x1]
    %v216 = vstv %s214
    %v217 = vmul.f32 %v216, %v215
    %v218 = vadd.f32 %v213, %v217
    %s219 = sld [smem:[#allocation4 + $0x1d]]
    %v220 = vld [vmem:[%s124 + $0x2] sm:$0x1]
    %v221 = vstv %s219
    %v222 = vmul.f32 %v221, %v220
    %v223 = vadd.f32 %v218, %v222
    %v224 = vtanh.pop %v223
    %v225 = vsel %vm174, %v224, 0.0
    %s226 = scalar_lea.vmem [#allocation9], 1
    %227 = vst [vmem:[%s226] sm:$0x1] %v225
    %s228 = sld [smem:[#allocation4 + $0x32]]
    %v229 = vstv %s228
    %s230 = sld [smem:[#allocation4 + $0x1e]]
    %v231 = vld [vmem:[#allocation3] sm:$0x1]
    %v232 = vstv %s230
    %v233 = vmul.f32 %v232, %v231
    %v234 = vadd.f32 %v229, %v233
    %s235 = sld [smem:[#allocation4 + $0x1f]]
    %v236 = vld [vmem:[#allocation3 + $0x1] sm:$0x1]
    %v237 = vstv %s235
    %v238 = vmul.f32 %v237, %v236
    %v239 = vadd.f32 %v234, %v238
    %s240 = sld [smem:[#allocation4 + $0x20]]
    %v241 = vld [vmem:[#allocation3 + $0x2] sm:$0x1]
    %v242 = vstv %s240
    %v243 = vmul.f32 %v242, %v241
    %v244 = vadd.f32 %v239, %v243
    %s245 = sld [smem:[#allocation4 + $0x21]]
    %v246 = vld [vmem:[%s97] sm:$0x1]
    %v247 = vstv %s245
    %v248 = vmul.f32 %v247, %v246
    %v249 = vadd.f32 %v244, %v248
    %s250 = sld [smem:[#allocation4 + $0x22]]
    %v251 = vld [vmem:[%s97 + $0x1] sm:$0x1]
    %v252 = vstv %s250
    %v253 = vmul.f32 %v252, %v251
    %v254 = vadd.f32 %v249, %v253
    %s255 = sld [smem:[#allocation4 + $0x23]]
    %v256 = vld [vmem:[%s97 + $0x2] sm:$0x1]
    %v257 = vstv %s255
    %v258 = vmul.f32 %v257, %v256
    %v259 = vadd.f32 %v254, %v258
    %s260 = sld [smem:[#allocation4 + $0x24]]
    %v261 = vld [vmem:[%s124] sm:$0x1]
    %v262 = vstv %s260
    %v263 = vmul.f32 %v262, %v261
    %v264 = vadd.f32 %v259, %v263
    %s265 = sld [smem:[#allocation4 + $0x25]]
    %v266 = vld [vmem:[%s124 + $0x1] sm:$0x1]
    %v267 = vstv %s265
    %v268 = vmul.f32 %v267, %v266
    %v269 = vadd.f32 %v264, %v268
    %s270 = sld [smem:[#allocation4 + $0x26]]
    %v271 = vld [vmem:[%s124 + $0x2] sm:$0x1]
    %v272 = vstv %s270
    %v273 = vmul.f32 %v272, %v271
    %v274 = vadd.f32 %v269, %v273
    %v275 = vtanh.pop %v274
    %v276 = vsel %vm174, %v275, 0.0
    %s277 = scalar_lea.vmem [#allocation9], 2
    %278 = vst [vmem:[%s277] sm:$0x1] %v276
    %s279 = sld [smem:[#allocation4 + $0x33]]
    %v280 = vstv %s279
    %s281 = sld [smem:[#allocation4 + $0x27]]
    %v282 = vld [vmem:[#allocation3] sm:$0x1]
    %v283 = vstv %s281
    %v284 = vmul.f32 %v283, %v282
    %v285 = vadd.f32 %v280, %v284
    %s286 = sld [smem:[#allocation4 + $0x28]]
    %v287 = vld [vmem:[#allocation3 + $0x1] sm:$0x1]
    %v288 = vstv %s286
    %v289 = vmul.f32 %v288, %v287
    %v290 = vadd.f32 %v285, %v289
    %s291 = sld [smem:[#allocation4 + $0x29]]
    %v292 = vld [vmem:[#allocation3 + $0x2] sm:$0x1]
    %v293 = vstv %s291
    %v294 = vmul.f32 %v293, %v292
    %v295 = vadd.f32 %v290, %v294
    %s296 = sld [smem:[#allocation4 + $0x2a]]
    %v297 = vld [vmem:[%s97] sm:$0x1]
    %v298 = vstv %s296
    %v299 = vmul.f32 %v298, %v297
    %v300 = vadd.f32 %v295, %v299
    %s301 = sld [smem:[#allocation4 + $0x2b]]
    %v302 = vld [vmem:[%s97 + $0x1] sm:$0x1]
    %v303 = vstv %s301
    %v304 = vmul.f32 %v303, %v302
    %v305 = vadd.f32 %v300, %v304
    %s306 = sld [smem:[#allocation4 + $0x2c]]
    %v307 = vld [vmem:[%s97 + $0x2] sm:$0x1]
    %v308 = vstv %s306
    %v309 = vmul.f32 %v308, %v307
    %v310 = vadd.f32 %v305, %v309
    %s311 = sld [smem:[#allocation4 + $0x2d]]
    %v312 = vld [vmem:[%s124] sm:$0x1]
    %v313 = vstv %s311
    %v314 = vmul.f32 %v313, %v312
    %v315 = vadd.f32 %v310, %v314
    %s316 = sld [smem:[#allocation4 + $0x2e]]
    %v317 = vld [vmem:[%s124 + $0x1] sm:$0x1]
    %v318 = vstv %s316
    %v319 = vmul.f32 %v318, %v317
    %v320 = vadd.f32 %v315, %v319
    %s321 = sld [smem:[#allocation4 + $0x2f]]
    %v322 = vld [vmem:[%s124 + $0x2] sm:$0x1]
    %v323 = vstv %s321
    %v324 = vmul.f32 %v323, %v322
    %v325 = vadd.f32 %v320, %v324
    %v326 = vtanh.pop %v325
    %v327 = vsel %vm174, %v326, 0.0
    %s328 = scalar_lea.vmem [#allocation9], 3
    %329 = vst [vmem:[%s328] sm:$0x1] %v327
    // Predicated region
    $region18: #{tpu_custom_call.1} parent=1 // pred_check
      _
    $region19: #{tpu_custom_call.1} parent=1 // pred_check_branch
      %331 = sbr.rel (0) target = $region21
    $region20: #{tpu_custom_call.1} parent=1 // pred_region
      %333 = vsyncadd [#allocation6], 0
      %s334 = sshll.u32 [#allocation9], 4
      %s335 = int_to_ptr.vmem [resolvable:$true] %s334
      %s336 = sshll.u32 %s2, 4
      %s337 = int_to_ptr.hbm [resolvable:$true] %s336
      %342 = dma.vmem_to_hbm [thread:$0]  %s335, 64, %s337, [#allocation6], 16, 16, 1
    $region21: #{tpu_custom_call.1} parent=1 // pred_fallthru
      _
    // Predicated region
    $region22: #{tpu_custom_call.1} parent=1 // pred_check
      _
    $region23: #{tpu_custom_call.1} parent=1 // pred_check_branch
      %344 = sbr.rel (0) target = $region25
    $region24: #{tpu_custom_call.1} parent=1 // pred_region
      %346 = dma.done [#allocation6], 64
    $region25: #{tpu_custom_call.1} parent=1 // pred_fallthru
      _
    %347 = vsyncpa [#allocation5], 1
    %348 = vsyncpa [#allocation6], 1
    %349 = vsyncpa [#allocation7], 1

</llo_original>
